<compile_context>
chip_gen: v5e
topology: v5e:2x2
jax: 0.10.0
libtpu: 0.0.40
codegen_flags: <defaults>
</compile_context>

<pallas_src>
import functools

import jax
import jax.numpy as jnp
from jax import lax
from jax.experimental import pallas as pl
from jax.experimental.pallas import tpu as pltpu
import numpy as np


def sentiment_kernel(emb_ref,                         # (T*B, E)  bf16, time-major rows
                     wih_f_ref, whh_f_ref, b_f_ref,   # (E,4H) bf16, (H,4H) bf16, (1,4H) f32
                     wih_b_ref, whh_b_ref, b_b_ref,   # backward direction
                     w1f_ref, w1b_ref, b1_ref,        # dense1 split: (H,50) bf16 x2, (1,50) f32
                     w2_ref, b2_ref,                  # (50,5) bf16, (1,5) f32
                     out_ref,                         # (B, 5)   f32
                     *, seq_len, batch):
    T, B = seq_len, batch
    H = whh_f_ref.shape[0]
    f32, bf16 = jnp.float32, jnp.bfloat16

    emb = emb_ref[...]                                # (T*B, E) bf16
    whh_f = whh_f_ref[...]
    whh_b = whh_b_ref[...]

    # ---- hoisted input projections (bias folded in once, outside the loop) ----
    # forward direction: ONE (T*B, E) x (E, 4H) MXU call instead of T tiny ones.
    gx_f = (jnp.dot(emb, wih_f_ref[...], preferred_element_type=f32)
            + b_f_ref[...])                           # (T*B, 4H) f32
    # backward direction: only the x_{T-1} step survives (see below).
    gx_b = (jnp.dot(emb[(T - 1) * B:, :], wih_b_ref[...],
                    preferred_element_type=f32)
            + b_b_ref[...])                           # (B, 4H) f32

    def cell(gates_x, h, c, whh):
        # only the recurrent h @ W_hh matmul remains on the serial path
        gates = gates_x + jnp.dot(h.astype(bf16), whh,
                                  preferred_element_type=f32)
        # NOTE: with H=32 each gate is a 32-lane subslice of one 128-lane vreg;
        # at larger H, pad gates to 128-lane multiples to avoid XLU relayouts.
        i = jax.nn.sigmoid(gates[:, 0:H])             # PyTorch gate order i,f,g,o
        f = jax.nn.sigmoid(gates[:, H:2 * H])
        g = jnp.tanh(gates[:, 2 * H:3 * H])
        o = jax.nn.sigmoid(gates[:, 3 * H:4 * H])
        c_new = f * c + i * g
        h_new = o * jnp.tanh(c_new)
        return h_new, c_new

    # ---- forward recurrence, fully unrolled (T is a small static constant) ----
    h = jnp.zeros((B, H), f32)
    c = jnp.zeros((B, H), f32)
    for t in range(T):                                # static unroll: LLO sees all iters
        h, c = cell(gx_f[t * B:(t + 1) * B, :], h, c, whh_f)
    h_f_last = h

    # ---- backward direction: output at t = T-1 is ONE step from the zero state ----
    h_b_last, _ = cell(gx_b, jnp.zeros((B, H), f32), jnp.zeros((B, H), f32),
                       whh_b)

    # ---- head at the last timestep only (view(batch,-1)[:,-1] discards the rest).
    #      dense1 is applied as two half matmuls -> no lane concatenate. ----
    z1 = (jnp.dot(h_f_last.astype(bf16), w1f_ref[...], preferred_element_type=f32)
          + jnp.dot(h_b_last.astype(bf16), w1b_ref[...], preferred_element_type=f32)
          + b1_ref[...])
    z1 = jnp.maximum(z1, 0.0)
    z2 = (jnp.dot(z1.astype(bf16), w2_ref[...], preferred_element_type=f32)
          + b2_ref[...])
    out_ref[...] = jax.nn.sigmoid(z2)


def sentiment_forward(x_ids, params):
    """x_ids: (B, T) int32 token ids. Returns (B,) like the PyTorch module."""
    bf16 = jnp.bfloat16
    # Embedding gather + layout glue stays in XLA.
    emb = params["embedding"][x_ids]                  # (B, T, E) f32
    B, T, E = emb.shape
    H = params["whh_f"].shape[0]
    # time-major flattened rows: row t*B + b  <->  (t, b)
    emb2d = jnp.transpose(emb, (1, 0, 2)).reshape(T * B, E).astype(bf16)

    # bf16 MXU operands; f32 accumulation / f32 h,c state and biases in-kernel.
    wih_f = params["wih_f"].astype(bf16)
    whh_f = params["whh_f"].astype(bf16)
    wih_b = params["wih_b"].astype(bf16)
    whh_b = params["whh_b"].astype(bf16)
    w1 = params["w1"].astype(bf16)
    w1f, w1b = w1[:H, :], w1[H:, :]                   # split -> no in-kernel concat
    w2 = params["w2"].astype(bf16)
    b_f, b_b = params["b_f"], params["b_b"]
    b1, b2 = params["b1"], params["b2"]

    flops = (2 * T * B * E * 4 * H                    # fwd input projection (one matmul)
             + 2 * B * E * 4 * H                      # bwd input projection (last step)
             + 2 * (T + 1) * B * H * 4 * H            # recurrent h @ W_hh matmuls
             + 2 * B * (2 * H * 50 + 50 * 5))         # head
    transcendentals = (T + 1) * B * 5 * H + B * 5
    args = (emb2d, wih_f, whh_f, b_f, wih_b, whh_b, b_b, w1f, w1b, b1, w2, b2)
    bytes_accessed = sum(a.size * a.dtype.itemsize for a in args) + B * 5 * 4

    vmem = pltpu.MemorySpace.VMEM
    out = pl.pallas_call(
        functools.partial(sentiment_kernel, seq_len=T, batch=B),
        out_shape=jax.ShapeDtypeStruct((B, 5), jnp.float32),
        in_specs=[pl.BlockSpec(memory_space=vmem)] * len(args),
        out_specs=pl.BlockSpec(memory_space=vmem),
        cost_estimate=pl.CostEstimate(flops=flops,
                                      transcendentals=transcendentals,
                                      bytes_accessed=bytes_accessed),
    )(*args)

    # PyTorch: out.view(batch, -1)[:, -1]  ==  sigmoid output at (t = T-1, class 4)
    return out[:, 4]


def reference_forward(x_ids, params):
    """Pure-JAX reference (PyTorch eval() semantics) with the same bf16-operand /
    f32-accumulation arithmetic as the kernel."""
    bf16, f32 = jnp.bfloat16, jnp.float32
    emb = params["embedding"][x_ids]                  # (B, T, E)
    B, T, _ = emb.shape
    H = params["whh_f"].shape[0]

    def run_dir(wih, whh, b, reverse):
        wih = wih.astype(bf16)
        whh = whh.astype(bf16)
        xs = emb[:, ::-1, :] if reverse else emb

        def step(carry, x_t):
            h, c = carry
            gates = (jnp.dot(x_t.astype(bf16), wih, preferred_element_type=f32)
                     + jnp.dot(h.astype(bf16), whh, preferred_element_type=f32)
                     + b)
            i = jax.nn.sigmoid(gates[:, 0:H])
            f = jax.nn.sigmoid(gates[:, H:2 * H])
            g = jnp.tanh(gates[:, 2 * H:3 * H])
            o = jax.nn.sigmoid(gates[:, 3 * H:4 * H])
            c = f * c + i * g
            h = o * jnp.tanh(c)
            return (h, c), h

        init = (jnp.zeros((B, H), f32), jnp.zeros((B, H), f32))
        _, hs = lax.scan(step, init, jnp.transpose(xs, (1, 0, 2)))
        hs = jnp.transpose(hs, (1, 0, 2))             # (B, T, H)
        return hs[:, ::-1, :] if reverse else hs

    hf = run_dir(params["wih_f"], params["whh_f"], params["b_f"][0], False)
    hb = run_dir(params["wih_b"], params["whh_b"], params["b_b"][0], True)
    h = jnp.concatenate([hf, hb], axis=-1)            # (B, T, 2H)
    z1 = jnp.maximum(jnp.dot(h.astype(bf16), params["w1"].astype(bf16),
                             preferred_element_type=f32) + params["b1"][0], 0.0)
    z2 = jax.nn.sigmoid(jnp.dot(z1.astype(bf16), params["w2"].astype(bf16),
                                preferred_element_type=f32) + params["b2"][0])
    return z2.reshape(B, -1)[:, -1]


def init_params(key, vocab_size, embedding_dim, hidden_dim):
    H = hidden_dim
    ks = jax.random.split(key, 12)
    u = lambda k, shape, s=0.1: jax.random.uniform(k, shape, jnp.float32, -s, s)
    return {
        "embedding": u(ks[0], (vocab_size, embedding_dim), 0.5),
        # forward-direction LSTM (weights stored transposed vs. PyTorch; gate order i,f,g,o)
        "wih_f": u(ks[1], (embedding_dim, 4 * H)),
        "whh_f": u(ks[2], (H, 4 * H)),
        "b_f":   u(ks[3], (1, 4 * H)),                # b_ih + b_hh combined
        # backward-direction LSTM
        "wih_b": u(ks[4], (embedding_dim, 4 * H)),
        "whh_b": u(ks[5], (H, 4 * H)),
        "b_b":   u(ks[6], (1, 4 * H)),
        # dense1: Linear(2H, 50)
        "w1": u(ks[7], (2 * H, 50)),
        "b1": u(ks[8], (1, 50)),
        # outputLayer: Linear(50, 5)
        "w2": u(ks[9], (50, 5)),
        "b2": u(ks[10], (1, 5)),
    }


if __name__ == "__main__":
    batch, seq_len = 2, 8
    vocab_size, embedding_dim, hidden_dim = 100, 64, 32

    key = jax.random.PRNGKey(0)
    k_params, k_x = jax.random.split(key)
    params = init_params(k_params, vocab_size, embedding_dim, hidden_dim)
    x = jax.random.randint(k_x, (batch, seq_len), 0, vocab_size, dtype=jnp.int32)

    out = jax.jit(sentiment_forward)(x, params)
    out = jax.block_until_ready(out)

    ref = reference_forward(x, params)
    assert out.shape == (batch,)
    np.testing.assert_allclose(np.asarray(out), np.asarray(ref),
                               rtol=2e-4, atol=2e-5)
    print("KERNEL_OK")
</pallas_src>

<mosaic_0001>
module attributes {stable_mosaic.version = 11 : i64} {
  func.func @sentiment_kernel(%arg0: memref<16x64xbf16, #tpu.memory_space<vmem>>, %arg1: memref<64x128xbf16, #tpu.memory_space<vmem>>, %arg2: memref<32x128xbf16, #tpu.memory_space<vmem>>, %arg3: memref<1x128xf32, #tpu.memory_space<vmem>>, %arg4: memref<64x128xbf16, #tpu.memory_space<vmem>>, %arg5: memref<32x128xbf16, #tpu.memory_space<vmem>>, %arg6: memref<1x128xf32, #tpu.memory_space<vmem>>, %arg7: memref<32x50xbf16, #tpu.memory_space<vmem>>, %arg8: memref<32x50xbf16, #tpu.memory_space<vmem>>, %arg9: memref<1x50xf32, #tpu.memory_space<vmem>>, %arg10: memref<50x5xbf16, #tpu.memory_space<vmem>>, %arg11: memref<1x5xf32, #tpu.memory_space<vmem>>, %arg12: memref<2x5xf32, #tpu.memory_space<vmem>>) attributes {dimension_semantics = [], scalar_prefetch = 0 : i64, scratch_operands = 0 : i64, tpu.core_type = #tpu.core_type<tc>} {
    %c0 = arith.constant 0 : index
    %c0_0 = arith.constant 0 : index
    %0 = vector.load %arg0[%c0, %c0_0] : memref<16x64xbf16, #tpu.memory_space<vmem>>, vector<16x64xbf16>
    %c0_1 = arith.constant 0 : index
    %c0_2 = arith.constant 0 : index
    %1 = vector.load %arg2[%c0_1, %c0_2] : memref<32x128xbf16, #tpu.memory_space<vmem>>, vector<32x128xbf16>
    %c0_3 = arith.constant 0 : index
    %c0_4 = arith.constant 0 : index
    %2 = vector.load %arg5[%c0_3, %c0_4] : memref<32x128xbf16, #tpu.memory_space<vmem>>, vector<32x128xbf16>
    %c0_5 = arith.constant 0 : index
    %c0_6 = arith.constant 0 : index
    %3 = vector.load %arg1[%c0_5, %c0_6] : memref<64x128xbf16, #tpu.memory_space<vmem>>, vector<64x128xbf16>
    %cst = arith.constant dense<0.000000e+00> : vector<16x128xf32>
    %4 = tpu.matmul %0, %3, %cst {dimension_numbers = #tpu.dot_dimension_numbers<[1], [0], [0], [1], [0, 0, 1, 1], [], []>} : vector<16x64xbf16>, vector<64x128xbf16>, vector<16x128xf32> -> vector<16x128xf32>
    %c0_7 = arith.constant 0 : index
    %c0_8 = arith.constant 0 : index
    %5 = vector.load %arg3[%c0_7, %c0_8] : memref<1x128xf32, #tpu.memory_space<vmem>>, vector<1x128xf32>
    %6 = vector.broadcast %5 : vector<1x128xf32> to vector<16x128xf32>
    %7 = arith.addf %4, %6 : vector<16x128xf32>
    %8 = vector.extract_strided_slice %0 {offsets = [14, 0], sizes = [2, 64], strides = [1, 1]} : vector<16x64xbf16> to vector<2x64xbf16>
    %c0_9 = arith.constant 0 : index
    %c0_10 = arith.constant 0 : index
    %9 = vector.load %arg4[%c0_9, %c0_10] : memref<64x128xbf16, #tpu.memory_space<vmem>>, vector<64x128xbf16>
    %cst_11 = arith.constant dense<0.000000e+00> : vector<2x128xf32>
    %10 = tpu.matmul %8, %9, %cst_11 {dimension_numbers = #tpu.dot_dimension_numbers<[1], [0], [0], [1], [0, 0, 1, 1], [], []>} : vector<2x64xbf16>, vector<64x128xbf16>, vector<2x128xf32> -> vector<2x128xf32>
    %c0_12 = arith.constant 0 : index
    %c0_13 = arith.constant 0 : index
    %11 = vector.load %arg6[%c0_12, %c0_13] : memref<1x128xf32, #tpu.memory_space<vmem>>, vector<1x128xf32>
    %12 = vector.broadcast %11 : vector<1x128xf32> to vector<2x128xf32>
    %13 = arith.addf %10, %12 : vector<2x128xf32>
    %cst_14 = arith.constant 0.000000e+00 : f32
    %14 = vector.broadcast %cst_14 : f32 to vector<2x32xf32>
    %cst_15 = arith.constant 0.000000e+00 : f32
    %15 = vector.broadcast %cst_15 : f32 to vector<2x32xf32>
    %16 = vector.extract_strided_slice %7 {offsets = [0, 0], sizes = [2, 128], strides = [1, 1]} : vector<16x128xf32> to vector<2x128xf32>
    %17 = arith.truncf %14 : vector<2x32xf32> to vector<2x32xbf16>
    %cst_16 = arith.constant dense<0.000000e+00> : vector<2x128xf32>
    %18 = tpu.matmul %17, %1, %cst_16 {dimension_numbers = #tpu.dot_dimension_numbers<[1], [0], [0], [1], [0, 0, 1, 1], [], []>} : vector<2x32xbf16>, vector<32x128xbf16>, vector<2x128xf32> -> vector<2x128xf32>
    %19 = arith.addf %16, %18 : vector<2x128xf32>
    %20 = vector.extract_strided_slice %19 {offsets = [0, 0], sizes = [2, 32], strides = [1, 1]} : vector<2x128xf32> to vector<2x32xf32>
    %21 = arith.negf %20 : vector<2x32xf32>
    %22 = math.exp %21 : vector<2x32xf32>
    %cst_17 = arith.constant 1.000000e+00 : f32
    %23 = vector.broadcast %cst_17 : f32 to vector<2x32xf32>
    %24 = arith.addf %23, %22 : vector<2x32xf32>
    %25 = arith.divf %23, %24 : vector<2x32xf32>
    %26 = vector.extract_strided_slice %19 {offsets = [0, 32], sizes = [2, 32], strides = [1, 1]} : vector<2x128xf32> to vector<2x32xf32>
    %27 = arith.negf %26 : vector<2x32xf32>
    %28 = math.exp %27 : vector<2x32xf32>
    %cst_18 = arith.constant 1.000000e+00 : f32
    %29 = vector.broadcast %cst_18 : f32 to vector<2x32xf32>
    %30 = arith.addf %29, %28 : vector<2x32xf32>
    %31 = arith.divf %29, %30 : vector<2x32xf32>
    %32 = vector.extract_strided_slice %19 {offsets = [0, 64], sizes = [2, 32], strides = [1, 1]} : vector<2x128xf32> to vector<2x32xf32>
    %33 = math.tanh %32 : vector<2x32xf32>
    %34 = vector.extract_strided_slice %19 {offsets = [0, 96], sizes = [2, 32], strides = [1, 1]} : vector<2x128xf32> to vector<2x32xf32>
    %35 = arith.negf %34 : vector<2x32xf32>
    %36 = math.exp %35 : vector<2x32xf32>
    %cst_19 = arith.constant 1.000000e+00 : f32
    %37 = vector.broadcast %cst_19 : f32 to vector<2x32xf32>
    %38 = arith.addf %37, %36 : vector<2x32xf32>
    %39 = arith.divf %37, %38 : vector<2x32xf32>
    %40 = arith.mulf %31, %15 : vector<2x32xf32>
    %41 = arith.mulf %25, %33 : vector<2x32xf32>
    %42 = arith.addf %40, %41 : vector<2x32xf32>
    %43 = math.tanh %42 : vector<2x32xf32>
    %44 = arith.mulf %39, %43 : vector<2x32xf32>
    %45 = vector.extract_strided_slice %7 {offsets = [2, 0], sizes = [2, 128], strides = [1, 1]} : vector<16x128xf32> to vector<2x128xf32>
    %46 = arith.truncf %44 : vector<2x32xf32> to vector<2x32xbf16>
    %cst_20 = arith.constant dense<0.000000e+00> : vector<2x128xf32>
    %47 = tpu.matmul %46, %1, %cst_20 {dimension_numbers = #tpu.dot_dimension_numbers<[1], [0], [0], [1], [0, 0, 1, 1], [], []>} : vector<2x32xbf16>, vector<32x128xbf16>, vector<2x128xf32> -> vector<2x128xf32>
    %48 = arith.addf %45, %47 : vector<2x128xf32>
    %49 = vector.extract_strided_slice %48 {offsets = [0, 0], sizes = [2, 32], strides = [1, 1]} : vector<2x128xf32> to vector<2x32xf32>
    %50 = arith.negf %49 : vector<2x32xf32>
    %51 = math.exp %50 : vector<2x32xf32>
    %cst_21 = arith.constant 1.000000e+00 : f32
    %52 = vector.broadcast %cst_21 : f32 to vector<2x32xf32>
    %53 = arith.addf %52, %51 : vector<2x32xf32>
    %54 = arith.divf %52, %53 : vector<2x32xf32>
    %55 = vector.extract_strided_slice %48 {offsets = [0, 32], sizes = [2, 32], strides = [1, 1]} : vector<2x128xf32> to vector<2x32xf32>
    %56 = arith.negf %55 : vector<2x32xf32>
    %57 = math.exp %56 : vector<2x32xf32>
    %cst_22 = arith.constant 1.000000e+00 : f32
    %58 = vector.broadcast %cst_22 : f32 to vector<2x32xf32>
    %59 = arith.addf %58, %57 : vector<2x32xf32>
    %60 = arith.divf %58, %59 : vector<2x32xf32>
    %61 = vector.extract_strided_slice %48 {offsets = [0, 64], sizes = [2, 32], strides = [1, 1]} : vector<2x128xf32> to vector<2x32xf32>
    %62 = math.tanh %61 : vector<2x32xf32>
    %63 = vector.extract_strided_slice %48 {offsets = [0, 96], sizes = [2, 32], strides = [1, 1]} : vector<2x128xf32> to vector<2x32xf32>
    %64 = arith.negf %63 : vector<2x32xf32>
    %65 = math.exp %64 : vector<2x32xf32>
    %cst_23 = arith.constant 1.000000e+00 : f32
    %66 = vector.broadcast %cst_23 : f32 to vector<2x32xf32>
    %67 = arith.addf %66, %65 : vector<2x32xf32>
    %68 = arith.divf %66, %67 : vector<2x32xf32>
    %69 = arith.mulf %60, %42 : vector<2x32xf32>
    %70 = arith.mulf %54, %62 : vector<2x32xf32>
    %71 = arith.addf %69, %70 : vector<2x32xf32>
    %72 = math.tanh %71 : vector<2x32xf32>
    %73 = arith.mulf %68, %72 : vector<2x32xf32>
    %74 = vector.extract_strided_slice %7 {offsets = [4, 0], sizes = [2, 128], strides = [1, 1]} : vector<16x128xf32> to vector<2x128xf32>
    %75 = arith.truncf %73 : vector<2x32xf32> to vector<2x32xbf16>
    %cst_24 = arith.constant dense<0.000000e+00> : vector<2x128xf32>
    %76 = tpu.matmul %75, %1, %cst_24 {dimension_numbers = #tpu.dot_dimension_numbers<[1], [0], [0], [1], [0, 0, 1, 1], [], []>} : vector<2x32xbf16>, vector<32x128xbf16>, vector<2x128xf32> -> vector<2x128xf32>
    %77 = arith.addf %74, %76 : vector<2x128xf32>
    %78 = vector.extract_strided_slice %77 {offsets = [0, 0], sizes = [2, 32], strides = [1, 1]} : vector<2x128xf32> to vector<2x32xf32>
    %79 = arith.negf %78 : vector<2x32xf32>
    %80 = math.exp %79 : vector<2x32xf32>
    %cst_25 = arith.constant 1.000000e+00 : f32
    %81 = vector.broadcast %cst_25 : f32 to vector<2x32xf32>
    %82 = arith.addf %81, %80 : vector<2x32xf32>
    %83 = arith.divf %81, %82 : vector<2x32xf32>
    %84 = vector.extract_strided_slice %77 {offsets = [0, 32], sizes = [2, 32], strides = [1, 1]} : vector<2x128xf32> to vector<2x32xf32>
    %85 = arith.negf %84 : vector<2x32xf32>
    %86 = math.exp %85 : vector<2x32xf32>
    %cst_26 = arith.constant 1.000000e+00 : f32
    %87 = vector.broadcast %cst_26 : f32 to vector<2x32xf32>
    %88 = arith.addf %87, %86 : vector<2x32xf32>
    %89 = arith.divf %87, %88 : vector<2x32xf32>
    %90 = vector.extract_strided_slice %77 {offsets = [0, 64], sizes = [2, 32], strides = [1, 1]} : vector<2x128xf32> to vector<2x32xf32>
    %91 = math.tanh %90 : vector<2x32xf32>
    %92 = vector.extract_strided_slice %77 {offsets = [0, 96], sizes = [2, 32], strides = [1, 1]} : vector<2x128xf32> to vector<2x32xf32>
    %93 = arith.negf %92 : vector<2x32xf32>
    %94 = math.exp %93 : vector<2x32xf32>
    %cst_27 = arith.constant 1.000000e+00 : f32
    %95 = vector.broadcast %cst_27 : f32 to vector<2x32xf32>
    %96 = arith.addf %95, %94 : vector<2x32xf32>
    %97 = arith.divf %95, %96 : vector<2x32xf32>
    %98 = arith.mulf %89, %71 : vector<2x32xf32>
    %99 = arith.mulf %83, %91 : vector<2x32xf32>
    %100 = arith.addf %98, %99 : vector<2x32xf32>
    %101 = math.tanh %100 : vector<2x32xf32>
    %102 = arith.mulf %97, %101 : vector<2x32xf32>
    %103 = vector.extract_strided_slice %7 {offsets = [6, 0], sizes = [2, 128], strides = [1, 1]} : vector<16x128xf32> to vector<2x128xf32>
    %104 = arith.truncf %102 : vector<2x32xf32> to vector<2x32xbf16>
    %cst_28 = arith.constant dense<0.000000e+00> : vector<2x128xf32>
    %105 = tpu.matmul %104, %1, %cst_28 {dimension_numbers = #tpu.dot_dimension_numbers<[1], [0], [0], [1], [0, 0, 1, 1], [], []>} : vector<2x32xbf16>, vector<32x128xbf16>, vector<2x128xf32> -> vector<2x128xf32>
    %106 = arith.addf %103, %105 : vector<2x128xf32>
    %107 = vector.extract_strided_slice %106 {offsets = [0, 0], sizes = [2, 32], strides = [1, 1]} : vector<2x128xf32> to vector<2x32xf32>
    %108 = arith.negf %107 : vector<2x32xf32>
    %109 = math.exp %108 : vector<2x32xf32>
    %cst_29 = arith.constant 1.000000e+00 : f32
    %110 = vector.broadcast %cst_29 : f32 to vector<2x32xf32>
    %111 = arith.addf %110, %109 : vector<2x32xf32>
    %112 = arith.divf %110, %111 : vector<2x32xf32>
    %113 = vector.extract_strided_slice %106 {offsets = [0, 32], sizes = [2, 32], strides = [1, 1]} : vector<2x128xf32> to vector<2x32xf32>
    %114 = arith.negf %113 : vector<2x32xf32>
    %115 = math.exp %114 : vector<2x32xf32>
    %cst_30 = arith.constant 1.000000e+00 : f32
    %116 = vector.broadcast %cst_30 : f32 to vector<2x32xf32>
    %117 = arith.addf %116, %115 : vector<2x32xf32>
    %118 = arith.divf %116, %117 : vector<2x32xf32>
    %119 = vector.extract_strided_slice %106 {offsets = [0, 64], sizes = [2, 32], strides = [1, 1]} : vector<2x128xf32> to vector<2x32xf32>
    %120 = math.tanh %119 : vector<2x32xf32>
    %121 = vector.extract_strided_slice %106 {offsets = [0, 96], sizes = [2, 32], strides = [1, 1]} : vector<2x128xf32> to vector<2x32xf32>
    %122 = arith.negf %121 : vector<2x32xf32>
    %123 = math.exp %122 : vector<2x32xf32>
    %cst_31 = arith.constant 1.000000e+00 : f32
    %124 = vector.broadcast %cst_31 : f32 to vector<2x32xf32>
    %125 = arith.addf %124, %123 : vector<2x32xf32>
    %126 = arith.divf %124, %125 : vector<2x32xf32>
    %127 = arith.mulf %118, %100 : vector<2x32xf32>
    %128 = arith.mulf %112, %120 : vector<2x32xf32>
    %129 = arith.addf %127, %128 : vector<2x32xf32>
    %130 = math.tanh %129 : vector<2x32xf32>
    %131 = arith.mulf %126, %130 : vector<2x32xf32>
    %132 = vector.extract_strided_slice %7 {offsets = [8, 0], sizes = [2, 128], strides = [1, 1]} : vector<16x128xf32> to vector<2x128xf32>
    %133 = arith.truncf %131 : vector<2x32xf32> to vector<2x32xbf16>
    %cst_32 = arith.constant dense<0.000000e+00> : vector<2x128xf32>
    %134 = tpu.matmul %133, %1, %cst_32 {dimension_numbers = #tpu.dot_dimension_numbers<[1], [0], [0], [1], [0, 0, 1, 1], [], []>} : vector<2x32xbf16>, vector<32x128xbf16>, vector<2x128xf32> -> vector<2x128xf32>
    %135 = arith.addf %132, %134 : vector<2x128xf32>
    %136 = vector.extract_strided_slice %135 {offsets = [0, 0], sizes = [2, 32], strides = [1, 1]} : vector<2x128xf32> to vector<2x32xf32>
    %137 = arith.negf %136 : vector<2x32xf32>
    %138 = math.exp %137 : vector<2x32xf32>
    %cst_33 = arith.constant 1.000000e+00 : f32
    %139 = vector.broadcast %cst_33 : f32 to vector<2x32xf32>
    %140 = arith.addf %139, %138 : vector<2x32xf32>
    %141 = arith.divf %139, %140 : vector<2x32xf32>
    %142 = vector.extract_strided_slice %135 {offsets = [0, 32], sizes = [2, 32], strides = [1, 1]} : vector<2x128xf32> to vector<2x32xf32>
    %143 = arith.negf %142 : vector<2x32xf32>
    %144 = math.exp %143 : vector<2x32xf32>
    %cst_34 = arith.constant 1.000000e+00 : f32
    %145 = vector.broadcast %cst_34 : f32 to vector<2x32xf32>
    %146 = arith.addf %145, %144 : vector<2x32xf32>
    %147 = arith.divf %145, %146 : vector<2x32xf32>
    %148 = vector.extract_strided_slice %135 {offsets = [0, 64], sizes = [2, 32], strides = [1, 1]} : vector<2x128xf32> to vector<2x32xf32>
    %149 = math.tanh %148 : vector<2x32xf32>
    %150 = vector.extract_strided_slice %135 {offsets = [0, 96], sizes = [2, 32], strides = [1, 1]} : vector<2x128xf32> to vector<2x32xf32>
    %151 = arith.negf %150 : vector<2x32xf32>
    %152 = math.exp %151 : vector<2x32xf32>
    %cst_35 = arith.constant 1.000000e+00 : f32
    %153 = vector.broadcast %cst_35 : f32 to vector<2x32xf32>
    %154 = arith.addf %153, %152 : vector<2x32xf32>
    %155 = arith.divf %153, %154 : vector<2x32xf32>
    %156 = arith.mulf %147, %129 : vector<2x32xf32>
    %157 = arith.mulf %141, %149 : vector<2x32xf32>
    %158 = arith.addf %156, %157 : vector<2x32xf32>
    %159 = math.tanh %158 : vector<2x32xf32>
    %160 = arith.mulf %155, %159 : vector<2x32xf32>
    %161 = vector.extract_strided_slice %7 {offsets = [10, 0], sizes = [2, 128], strides = [1, 1]} : vector<16x128xf32> to vector<2x128xf32>
    %162 = arith.truncf %160 : vector<2x32xf32> to vector<2x32xbf16>
    %cst_36 = arith.constant dense<0.000000e+00> : vector<2x128xf32>
    %163 = tpu.matmul %162, %1, %cst_36 {dimension_numbers = #tpu.dot_dimension_numbers<[1], [0], [0], [1], [0, 0, 1, 1], [], []>} : vector<2x32xbf16>, vector<32x128xbf16>, vector<2x128xf32> -> vector<2x128xf32>
    %164 = arith.addf %161, %163 : vector<2x128xf32>
    %165 = vector.extract_strided_slice %164 {offsets = [0, 0], sizes = [2, 32], strides = [1, 1]} : vector<2x128xf32> to vector<2x32xf32>
    %166 = arith.negf %165 : vector<2x32xf32>
    %167 = math.exp %166 : vector<2x32xf32>
    %cst_37 = arith.constant 1.000000e+00 : f32
    %168 = vector.broadcast %cst_37 : f32 to vector<2x32xf32>
    %169 = arith.addf %168, %167 : vector<2x32xf32>
    %170 = arith.divf %168, %169 : vector<2x32xf32>
    %171 = vector.extract_strided_slice %164 {offsets = [0, 32], sizes = [2, 32], strides = [1, 1]} : vector<2x128xf32> to vector<2x32xf32>
    %172 = arith.negf %171 : vector<2x32xf32>
    %173 = math.exp %172 : vector<2x32xf32>
    %cst_38 = arith.constant 1.000000e+00 : f32
    %174 = vector.broadcast %cst_38 : f32 to vector<2x32xf32>
    %175 = arith.addf %174, %173 : vector<2x32xf32>
    %176 = arith.divf %174, %175 : vector<2x32xf32>
    %177 = vector.extract_strided_slice %164 {offsets = [0, 64], sizes = [2, 32], strides = [1, 1]} : vector<2x128xf32> to vector<2x32xf32>
    %178 = math.tanh %177 : vector<2x32xf32>
    %179 = vector.extract_strided_slice %164 {offsets = [0, 96], sizes = [2, 32], strides = [1, 1]} : vector<2x128xf32> to vector<2x32xf32>
    %180 = arith.negf %179 : vector<2x32xf32>
    %181 = math.exp %180 : vector<2x32xf32>
    %cst_39 = arith.constant 1.000000e+00 : f32
    %182 = vector.broadcast %cst_39 : f32 to vector<2x32xf32>
    %183 = arith.addf %182, %181 : vector<2x32xf32>
    %184 = arith.divf %182, %183 : vector<2x32xf32>
    %185 = arith.mulf %176, %158 : vector<2x32xf32>
    %186 = arith.mulf %170, %178 : vector<2x32xf32>
    %187 = arith.addf %185, %186 : vector<2x32xf32>
    %188 = math.tanh %187 : vector<2x32xf32>
    %189 = arith.mulf %184, %188 : vector<2x32xf32>
    %190 = vector.extract_strided_slice %7 {offsets = [12, 0], sizes = [2, 128], strides = [1, 1]} : vector<16x128xf32> to vector<2x128xf32>
    %191 = arith.truncf %189 : vector<2x32xf32> to vector<2x32xbf16>
    %cst_40 = arith.constant dense<0.000000e+00> : vector<2x128xf32>
    %192 = tpu.matmul %191, %1, %cst_40 {dimension_numbers = #tpu.dot_dimension_numbers<[1], [0], [0], [1], [0, 0, 1, 1], [], []>} : vector<2x32xbf16>, vector<32x128xbf16>, vector<2x128xf32> -> vector<2x128xf32>
    %193 = arith.addf %190, %192 : vector<2x128xf32>
    %194 = vector.extract_strided_slice %193 {offsets = [0, 0], sizes = [2, 32], strides = [1, 1]} : vector<2x128xf32> to vector<2x32xf32>
    %195 = arith.negf %194 : vector<2x32xf32>
    %196 = math.exp %195 : vector<2x32xf32>
    %cst_41 = arith.constant 1.000000e+00 : f32
    %197 = vector.broadcast %cst_41 : f32 to vector<2x32xf32>
    %198 = arith.addf %197, %196 : vector<2x32xf32>
    %199 = arith.divf %197, %198 : vector<2x32xf32>
    %200 = vector.extract_strided_slice %193 {offsets = [0, 32], sizes = [2, 32], strides = [1, 1]} : vector<2x128xf32> to vector<2x32xf32>
    %201 = arith.negf %200 : vector<2x32xf32>
    %202 = math.exp %201 : vector<2x32xf32>
    %cst_42 = arith.constant 1.000000e+00 : f32
    %203 = vector.broadcast %cst_42 : f32 to vector<2x32xf32>
    %204 = arith.addf %203, %202 : vector<2x32xf32>
    %205 = arith.divf %203, %204 : vector<2x32xf32>
    %206 = vector.extract_strided_slice %193 {offsets = [0, 64], sizes = [2, 32], strides = [1, 1]} : vector<2x128xf32> to vector<2x32xf32>
    %207 = math.tanh %206 : vector<2x32xf32>
    %208 = vector.extract_strided_slice %193 {offsets = [0, 96], sizes = [2, 32], strides = [1, 1]} : vector<2x128xf32> to vector<2x32xf32>
    %209 = arith.negf %208 : vector<2x32xf32>
    %210 = math.exp %209 : vector<2x32xf32>
    %cst_43 = arith.constant 1.000000e+00 : f32
    %211 = vector.broadcast %cst_43 : f32 to vector<2x32xf32>
    %212 = arith.addf %211, %210 : vector<2x32xf32>
    %213 = arith.divf %211, %212 : vector<2x32xf32>
    %214 = arith.mulf %205, %187 : vector<2x32xf32>
    %215 = arith.mulf %199, %207 : vector<2x32xf32>
    %216 = arith.addf %214, %215 : vector<2x32xf32>
    %217 = math.tanh %216 : vector<2x32xf32>
    %218 = arith.mulf %213, %217 : vector<2x32xf32>
    %219 = vector.extract_strided_slice %7 {offsets = [14, 0], sizes = [2, 128], strides = [1, 1]} : vector<16x128xf32> to vector<2x128xf32>
    %220 = arith.truncf %218 : vector<2x32xf32> to vector<2x32xbf16>
    %cst_44 = arith.constant dense<0.000000e+00> : vector<2x128xf32>
    %221 = tpu.matmul %220, %1, %cst_44 {dimension_numbers = #tpu.dot_dimension_numbers<[1], [0], [0], [1], [0, 0, 1, 1], [], []>} : vector<2x32xbf16>, vector<32x128xbf16>, vector<2x128xf32> -> vector<2x128xf32>
    %222 = arith.addf %219, %221 : vector<2x128xf32>
    %223 = vector.extract_strided_slice %222 {offsets = [0, 0], sizes = [2, 32], strides = [1, 1]} : vector<2x128xf32> to vector<2x32xf32>
    %224 = arith.negf %223 : vector<2x32xf32>
    %225 = math.exp %224 : vector<2x32xf32>
    %cst_45 = arith.constant 1.000000e+00 : f32
    %226 = vector.broadcast %cst_45 : f32 to vector<2x32xf32>
    %227 = arith.addf %226, %225 : vector<2x32xf32>
    %228 = arith.divf %226, %227 : vector<2x32xf32>
    %229 = vector.extract_strided_slice %222 {offsets = [0, 32], sizes = [2, 32], strides = [1, 1]} : vector<2x128xf32> to vector<2x32xf32>
    %230 = arith.negf %229 : vector<2x32xf32>
    %231 = math.exp %230 : vector<2x32xf32>
    %cst_46 = arith.constant 1.000000e+00 : f32
    %232 = vector.broadcast %cst_46 : f32 to vector<2x32xf32>
    %233 = arith.addf %232, %231 : vector<2x32xf32>
    %234 = arith.divf %232, %233 : vector<2x32xf32>
    %235 = vector.extract_strided_slice %222 {offsets = [0, 64], sizes = [2, 32], strides = [1, 1]} : vector<2x128xf32> to vector<2x32xf32>
    %236 = math.tanh %235 : vector<2x32xf32>
    %237 = vector.extract_strided_slice %222 {offsets = [0, 96], sizes = [2, 32], strides = [1, 1]} : vector<2x128xf32> to vector<2x32xf32>
    %238 = arith.negf %237 : vector<2x32xf32>
    %239 = math.exp %238 : vector<2x32xf32>
    %cst_47 = arith.constant 1.000000e+00 : f32
    %240 = vector.broadcast %cst_47 : f32 to vector<2x32xf32>
    %241 = arith.addf %240, %239 : vector<2x32xf32>
    %242 = arith.divf %240, %241 : vector<2x32xf32>
    %243 = arith.mulf %234, %216 : vector<2x32xf32>
    %244 = arith.mulf %228, %236 : vector<2x32xf32>
    %245 = arith.addf %243, %244 : vector<2x32xf32>
    %246 = math.tanh %245 : vector<2x32xf32>
    %247 = arith.mulf %242, %246 : vector<2x32xf32>
    %cst_48 = arith.constant 0.000000e+00 : f32
    %248 = vector.broadcast %cst_48 : f32 to vector<2x32xf32>
    %cst_49 = arith.constant 0.000000e+00 : f32
    %249 = vector.broadcast %cst_49 : f32 to vector<2x32xf32>
    %250 = arith.truncf %248 : vector<2x32xf32> to vector<2x32xbf16>
    %cst_50 = arith.constant dense<0.000000e+00> : vector<2x128xf32>
    %251 = tpu.matmul %250, %2, %cst_50 {dimension_numbers = #tpu.dot_dimension_numbers<[1], [0], [0], [1], [0, 0, 1, 1], [], []>} : vector<2x32xbf16>, vector<32x128xbf16>, vector<2x128xf32> -> vector<2x128xf32>
    %252 = arith.addf %13, %251 : vector<2x128xf32>
    %253 = vector.extract_strided_slice %252 {offsets = [0, 0], sizes = [2, 32], strides = [1, 1]} : vector<2x128xf32> to vector<2x32xf32>
    %254 = arith.negf %253 : vector<2x32xf32>
    %255 = math.exp %254 : vector<2x32xf32>
    %cst_51 = arith.constant 1.000000e+00 : f32
    %256 = vector.broadcast %cst_51 : f32 to vector<2x32xf32>
    %257 = arith.addf %256, %255 : vector<2x32xf32>
    %258 = arith.divf %256, %257 : vector<2x32xf32>
    %259 = vector.extract_strided_slice %252 {offsets = [0, 32], sizes = [2, 32], strides = [1, 1]} : vector<2x128xf32> to vector<2x32xf32>
    %260 = arith.negf %259 : vector<2x32xf32>
    %261 = math.exp %260 : vector<2x32xf32>
    %cst_52 = arith.constant 1.000000e+00 : f32
    %262 = vector.broadcast %cst_52 : f32 to vector<2x32xf32>
    %263 = arith.addf %262, %261 : vector<2x32xf32>
    %264 = arith.divf %262, %263 : vector<2x32xf32>
    %265 = vector.extract_strided_slice %252 {offsets = [0, 64], sizes = [2, 32], strides = [1, 1]} : vector<2x128xf32> to vector<2x32xf32>
    %266 = math.tanh %265 : vector<2x32xf32>
    %267 = vector.extract_strided_slice %252 {offsets = [0, 96], sizes = [2, 32], strides = [1, 1]} : vector<2x128xf32> to vector<2x32xf32>
    %268 = arith.negf %267 : vector<2x32xf32>
    %269 = math.exp %268 : vector<2x32xf32>
    %cst_53 = arith.constant 1.000000e+00 : f32
    %270 = vector.broadcast %cst_53 : f32 to vector<2x32xf32>
    %271 = arith.addf %270, %269 : vector<2x32xf32>
    %272 = arith.divf %270, %271 : vector<2x32xf32>
    %273 = arith.mulf %264, %249 : vector<2x32xf32>
    %274 = arith.mulf %258, %266 : vector<2x32xf32>
    %275 = arith.addf %273, %274 : vector<2x32xf32>
    %276 = math.tanh %275 : vector<2x32xf32>
    %277 = arith.mulf %272, %276 : vector<2x32xf32>
    %278 = arith.truncf %247 : vector<2x32xf32> to vector<2x32xbf16>
    %c0_54 = arith.constant 0 : index
    %c0_55 = arith.constant 0 : index
    %279 = vector.load %arg7[%c0_54, %c0_55] : memref<32x50xbf16, #tpu.memory_space<vmem>>, vector<32x50xbf16>
    %cst_56 = arith.constant dense<0.000000e+00> : vector<2x50xf32>
    %280 = tpu.matmul %278, %279, %cst_56 {dimension_numbers = #tpu.dot_dimension_numbers<[1], [0], [0], [1], [0, 0, 1, 1], [], []>} : vector<2x32xbf16>, vector<32x50xbf16>, vector<2x50xf32> -> vector<2x50xf32>
    %281 = arith.truncf %277 : vector<2x32xf32> to vector<2x32xbf16>
    %c0_57 = arith.constant 0 : index
    %c0_58 = arith.constant 0 : index
    %282 = vector.load %arg8[%c0_57, %c0_58] : memref<32x50xbf16, #tpu.memory_space<vmem>>, vector<32x50xbf16>
    %cst_59 = arith.constant dense<0.000000e+00> : vector<2x50xf32>
    %283 = tpu.matmul %281, %282, %cst_59 {dimension_numbers = #tpu.dot_dimension_numbers<[1], [0], [0], [1], [0, 0, 1, 1], [], []>} : vector<2x32xbf16>, vector<32x50xbf16>, vector<2x50xf32> -> vector<2x50xf32>
    %284 = arith.addf %280, %283 : vector<2x50xf32>
    %c0_60 = arith.constant 0 : index
    %c0_61 = arith.constant 0 : index
    %285 = vector.load %arg9[%c0_60, %c0_61] : memref<1x50xf32, #tpu.memory_space<vmem>>, vector<1x50xf32>
    %286 = vector.broadcast %285 : vector<1x50xf32> to vector<2x50xf32>
    %287 = arith.addf %284, %286 : vector<2x50xf32>
    %cst_62 = arith.constant 0.000000e+00 : f32
    %288 = vector.broadcast %cst_62 : f32 to vector<2x50xf32>
    %289 = arith.maximumf %287, %288 : vector<2x50xf32>
    %290 = arith.truncf %289 : vector<2x50xf32> to vector<2x50xbf16>
    %c0_63 = arith.constant 0 : index
    %c0_64 = arith.constant 0 : index
    %291 = vector.load %arg10[%c0_63, %c0_64] : memref<50x5xbf16, #tpu.memory_space<vmem>>, vector<50x5xbf16>
    %cst_65 = arith.constant dense<0.000000e+00> : vector<2x5xf32>
    %292 = tpu.matmul %290, %291, %cst_65 {dimension_numbers = #tpu.dot_dimension_numbers<[1], [0], [0], [1], [0, 0, 1, 1], [], []>} : vector<2x50xbf16>, vector<50x5xbf16>, vector<2x5xf32> -> vector<2x5xf32>
    %c0_66 = arith.constant 0 : index
    %c0_67 = arith.constant 0 : index
    %293 = vector.load %arg11[%c0_66, %c0_67] : memref<1x5xf32, #tpu.memory_space<vmem>>, vector<1x5xf32>
    %294 = vector.broadcast %293 : vector<1x5xf32> to vector<2x5xf32>
    %295 = arith.addf %292, %294 : vector<2x5xf32>
    %296 = arith.negf %295 : vector<2x5xf32>
    %297 = math.exp %296 : vector<2x5xf32>
    %cst_68 = arith.constant 1.000000e+00 : f32
    %298 = vector.broadcast %cst_68 : f32 to vector<2x5xf32>
    %299 = arith.addf %298, %297 : vector<2x5xf32>
    %300 = arith.divf %298, %299 : vector<2x5xf32>
    %c0_69 = arith.constant 0 : index
    %c0_70 = arith.constant 0 : index
    %301 = vector.load %arg12[%c0_69, %c0_70] : memref<2x5xf32, #tpu.memory_space<vmem>>, vector<2x5xf32>
    tpu.vector_store %arg12[%c0_69, %c0_70], %300 {strides = array<i32>} : memref<2x5xf32, #tpu.memory_space<vmem>>, vector<2x5xf32>,
    return
  }
}

</mosaic_0001>

<llo_original>
// kernel: sentiment_forward.1
$region0: #{sentiment_forward.1}
  #allocation0 [shape = 'u32[]', space=smem, size = 0x4, offset = 0x4, fixed_abs, tag = 'smem constant byte address 0x4 - core index']
  #allocation1 [shape = 'u32[72,128]{1,0:T(1,128)}', space=vmem, size = 0x9000, scoped, tag = 'internal scratch']
  %s0 = inlined_call_operand.vmem [shape: bf16[16,64], index: 0, kind: input, shape index: {}]
  %s1 = inlined_call_operand.vmem [shape: bf16[64,128], index: 1, kind: input, shape index: {}]
  %s2 = inlined_call_operand.vmem [shape: bf16[32,128], index: 2, kind: input, shape index: {}]
  %s3 = inlined_call_operand.vmem [shape: f32[1,128], index: 3, kind: input, shape index: {}]
  %s4 = inlined_call_operand.vmem [shape: bf16[64,128], index: 4, kind: input, shape index: {}]
  %s5 = inlined_call_operand.vmem [shape: bf16[32,128], index: 5, kind: input, shape index: {}]
  %s6 = inlined_call_operand.vmem [shape: f32[1,128], index: 6, kind: input, shape index: {}]
  %s7 = inlined_call_operand.vmem [shape: bf16[32,50], index: 7, kind: input, shape index: {}]
  %s8 = inlined_call_operand.vmem [shape: bf16[32,50], index: 8, kind: input, shape index: {}]
  %s9 = inlined_call_operand.vmem [shape: f32[1,50], index: 9, kind: input, shape index: {}]
  %s10 = inlined_call_operand.vmem [shape: bf16[50,5], index: 10, kind: input, shape index: {}]
  %s11 = inlined_call_operand.vmem [shape: f32[1,5], index: 11, kind: input, shape index: {}]
  %s12 = inlined_call_operand.vmem [shape: f32[2,5], index: 12, kind: output, shape index: {}]
  %s13 = sld [smem:[#allocation0]]
  $region58: #{sentiment_forward.1} parent=0
    _
  %s15 = ssub.s32 1, %s13
  %s16 = scalar_select 0, %s15, %s13
  // Predicated region
  $region2: #{sentiment_forward.1} parent=0 // pred_check
    _
  $region3: #{sentiment_forward.1} parent=0 // pred_check_branch
    %18 = sbr.rel (0) target = $region5
  $region4: #{sentiment_forward.1} parent=0 // pred_region
    _
  $region5: #{sentiment_forward.1} parent=0 // pred_fallthru
    _
  // Predicated region
  $region6: #{sentiment_forward.1} parent=0 // pred_check
    _
  $region7: #{sentiment_forward.1} parent=0 // pred_check_branch
    %20 = sbr.rel (0) target = $region9
  $region8: #{sentiment_forward.1} parent=0 // pred_region
    _
  $region9: #{sentiment_forward.1} parent=0 // pred_fallthru
    _
  // Predicated region
  $region10: #{sentiment_forward.1} parent=0 // pred_check
    _
  $region11: #{sentiment_forward.1} parent=0 // pred_check_branch
    %22 = sbr.rel (0) target = $region13
  $region12: #{sentiment_forward.1} parent=0 // pred_region
    _
  $region13: #{sentiment_forward.1} parent=0 // pred_fallthru
    _
  // Predicated region
  $region14: #{sentiment_forward.1} parent=0 // pred_check
    _
  $region15: #{sentiment_forward.1} parent=0 // pred_check_branch
    %24 = sbr.rel (0) target = $region17
  $region16: #{sentiment_forward.1} parent=0 // pred_region
    _
  $region17: #{sentiment_forward.1} parent=0 // pred_fallthru
    _
  // Predicated region
  $region18: #{sentiment_forward.1} parent=0 // pred_check
    _
  $region19: #{sentiment_forward.1} parent=0 // pred_check_branch
    %26 = sbr.rel (0) target = $region21
  $region20: #{sentiment_forward.1} parent=0 // pred_region
    _
  $region21: #{sentiment_forward.1} parent=0 // pred_fallthru
    _
  // Predicated region
  $region22: #{sentiment_forward.1} parent=0 // pred_check
    _
  $region23: #{sentiment_forward.1} parent=0 // pred_check_branch
    %28 = sbr.rel (0) target = $region25
  $region24: #{sentiment_forward.1} parent=0 // pred_region
    _
  $region25: #{sentiment_forward.1} parent=0 // pred_fallthru
    _
  // Predicated region
  $region26: #{sentiment_forward.1} parent=0 // pred_check
    _
  $region27: #{sentiment_forward.1} parent=0 // pred_check_branch
    %30 = sbr.rel (0) target = $region29
  $region28: #{sentiment_forward.1} parent=0 // pred_region
    _
  $region29: #{sentiment_forward.1} parent=0 // pred_fallthru
    _
  // Predicated region
  $region30: #{sentiment_forward.1} parent=0 // pred_check
    _
  $region31: #{sentiment_forward.1} parent=0 // pred_check_branch
    %32 = sbr.rel (0) target = $region33
  $region32: #{sentiment_forward.1} parent=0 // pred_region
    _
  $region33: #{sentiment_forward.1} parent=0 // pred_fallthru
    _
  // Predicated region
  $region34: #{sentiment_forward.1} parent=0 // pred_check
    _
  $region35: #{sentiment_forward.1} parent=0 // pred_check_branch
    %34 = sbr.rel (0) target = $region37
  $region36: #{sentiment_forward.1} parent=0 // pred_region
    _
  $region37: #{sentiment_forward.1} parent=0 // pred_fallthru
    _
  // Predicated region
  $region38: #{sentiment_forward.1} parent=0 // pred_check
    _
  $region39: #{sentiment_forward.1} parent=0 // pred_check_branch
    %36 = sbr.rel (0) target = $region41
  $region40: #{sentiment_forward.1} parent=0 // pred_region
    _
  $region41: #{sentiment_forward.1} parent=0 // pred_fallthru
    _
  // Predicated region
  $region42: #{sentiment_forward.1} parent=0 // pred_check
    _
  $region43: #{sentiment_forward.1} parent=0 // pred_check_branch
    %38 = sbr.rel (0) target = $region45
  $region44: #{sentiment_forward.1} parent=0 // pred_region
    _
  $region45: #{sentiment_forward.1} parent=0 // pred_fallthru
    _
  // Predicated region
  $region46: #{sentiment_forward.1} parent=0 // pred_check
    _
  $region47: #{sentiment_forward.1} parent=0 // pred_check_branch
    %40 = sbr.rel (0) target = $region49
  $region48: #{sentiment_forward.1} parent=0 // pred_region
    _
  $region49: #{sentiment_forward.1} parent=0 // pred_fallthru
    _
  %v42 = vld [vmem:[%s0] sm:$0xf]
  %v43 = vld [vmem:[%s0 + $0x4] sm:$0xf]
  %v44 = vld [vmem:[%s2] sm:$0xf]
  %v45 = vld [vmem:[%s2 + $0x4] sm:$0xf]
  %v46 = vld [vmem:[%s2 + $0x8] sm:$0xf]
  %v47 = vld [vmem:[%s2 + $0xc] sm:$0xf]
  %v48 = vld [vmem:[%s5] sm:$0xf]
  %v49 = vld [vmem:[%s5 + $0x4] sm:$0xf]
  %v50 = vld [vmem:[%s5 + $0x8] sm:$0xf]
  %v51 = vld [vmem:[%s5 + $0xc] sm:$0xf]
  %v52 = vld [vmem:[%s1] sm:$0xf]
  %v53 = vld [vmem:[%s1 + $0x4] sm:$0xf]
  %v54 = vld [vmem:[%s1 + $0x8] sm:$0xf]
  %v55 = vld [vmem:[%s1 + $0xc] sm:$0xf]
  %v56 = vld [vmem:[%s1 + $0x10] sm:$0xf]
  %v57 = vld [vmem:[%s1 + $0x14] sm:$0xf]
  %v58 = vld [vmem:[%s1 + $0x18] sm:$0xf]
  %v59 = vld [vmem:[%s1 + $0x1c] sm:$0xf]
  %v60 = vld [vmem:[%s3] sm:$0x1]
  %v62 = vperm.slane %v60, 0
  %v66 = vunpack.c.l.b16 %v42
  %v67 = vunpack.c.l.b16 %v43
  %v68 = vpack.c.b16 %v67, %v66
  %v77 = vunpack.c.l.b16 %v52
  %v78 = vunpack.c.l.b16 %v53
  %v79 = vunpack.c.l.b16 %v54
  %v80 = vunpack.c.l.b16 %v55
  %v81 = vunpack.c.l.b16 %v56
  %v82 = vunpack.c.l.b16 %v57
  %v83 = vunpack.c.l.b16 %v58
  %v84 = vunpack.c.l.b16 %v59
  %v85 = vpack.c.b16 %v78, %v77
  %v86 = vpack.c.b16 %v80, %v79
  %v87 = vpack.c.b16 %v82, %v81
  %v88 = vpack.c.b16 %v84, %v83
  %vm93 = vcmask 523264
  %v95 = vsel %vm93, %v68, 0
  %97 = vmatpush.bf16.msra.mxu0 0
  %98 = vmatpush.bf16.msra.mxu0 0
  %99 = vmatpush.bf16.msra.mxu0 0
  %100 = vmatpush.bf16.msra.mxu0 0
  %101 = vmatpush.bf16.msra.mxu0 %v88
  %102 = vmatpush.bf16.msra.mxu0 %v87
  %103 = vmatpush.bf16.msra.mxu0 %v86
  %104 = vmatpush.bf16.msra.mxu0 %v85
  %105 = vmatmul.bf16.gmra.mxu0 %v95
  %v106 = vpop.f32.mrf.mxu0
  %v107 = vadd.f32 %v62, %v106
  %v108 = vpop.f32.mrf.mxu0
  %v109 = vadd.f32 %v62, %v108
  %110 = vdwg.mxu0
  %v111 = vld [vmem:[%s4] sm:$0xf]
  %v112 = vld [vmem:[%s4 + $0x4] sm:$0xf]
  %v113 = vld [vmem:[%s4 + $0x8] sm:$0xf]
  %v114 = vld [vmem:[%s4 + $0xc] sm:$0xf]
  %v115 = vld [vmem:[%s4 + $0x10] sm:$0xf]
  %v116 = vld [vmem:[%s4 + $0x14] sm:$0xf]
  %v117 = vld [vmem:[%s4 + $0x18] sm:$0xf]
  %v118 = vld [vmem:[%s4 + $0x1c] sm:$0xf]
  %v119 = vld [vmem:[%s6] sm:$0x1]
  %v121 = vperm.slane %v119, 0
  %v123 = vpack.c.b16 %v67, %v67
  %v124 = vrot.slane %v123, 3
  %v133 = vunpack.c.l.b16 %v111
  %v134 = vunpack.c.l.b16 %v112
  %v135 = vunpack.c.l.b16 %v113
  %v136 = vunpack.c.l.b16 %v114
  %v137 = vunpack.c.l.b16 %v115
  %v138 = vunpack.c.l.b16 %v116
  %v139 = vunpack.c.l.b16 %v117
  %v140 = vunpack.c.l.b16 %v118
  %v141 = vpack.c.b16 %v134, %v133
  %v142 = vpack.c.b16 %v136, %v135
  %v143 = vpack.c.b16 %v138, %v137
  %v144 = vpack.c.b16 %v140, %v139
  %v150 = vsel %vm93, %v124, 0
  %152 = vmatpush.bf16.msra.mxu0 0
  %153 = vmatpush.bf16.msra.mxu0 0
  %154 = vmatpush.bf16.msra.mxu0 0
  %155 = vmatpush.bf16.msra.mxu0 0
  %156 = vmatpush.bf16.msra.mxu0 %v144
  %157 = vmatpush.bf16.msra.mxu0 %v143
  %158 = vmatpush.bf16.msra.mxu0 %v142
  %159 = vmatpush.bf16.msra.mxu0 %v141
  %160 = vmatmul.bf16.gmra.mxu0 %v150
  %v161 = vpop.f32.mrf.mxu0
  %v162 = vadd.f32 %v121, %v161
  %v163 = vpop.f32.mrf.mxu0
  %164 = vdwg.mxu0
  %v169 = vunpack.c.l.b16 %v44
  %v170 = vunpack.c.l.b16 %v45
  %v171 = vunpack.c.l.b16 %v46
  %v172 = vunpack.c.l.b16 %v47
  %v173 = vpack.c.b16 %v170, %v169
  %v174 = vpack.c.b16 %v172, %v171
  %vm177 = vcmask 261120
  %v179 = vsel %vm177, 0, 0
  %181 = vmatpush.bf16.msra.mxu0 0
  %182 = vmatpush.bf16.msra.mxu0 0
  %183 = vmatpush.bf16.msra.mxu0 0
  %184 = vmatpush.bf16.msra.mxu0 0
  %185 = vmatpush.bf16.msra.mxu0 0
  %186 = vmatpush.bf16.msra.mxu0 0
  %187 = vmatpush.bf16.msra.mxu0 %v174
  %188 = vmatpush.bf16.msra.mxu0 %v173
  %189 = vmatmul.bf16.gmra.mxu0 %v179
  %v190 = vpop.f32.mrf.mxu0
  %v191 = vadd.f32 0.0, %v190
  %v192 = vpop.f32.mrf.mxu0
  %193 = vdwg.mxu0
  %v194 = vadd.f32 %v107, %v191
  %v195 = vxor.u32 %v194, 2147483648
  %v196 = vmul.f32 %v195, 1.442695
  %v197 = vpow.pop %v196
  %v198 = vadd.f32 %v197, 1.0
  %v199 = vrcp.pop %v198
  %v200 = vmul.f32 %v198, %v199
  %v201 = vsub.f32 1.0, %v200
  %v202 = vmul.f32 %v199, %v201
  %v203 = vadd.f32 %v199, %v202
  %vm204 = vweird.f32 %v198
  %vm205 = vweird.f32 %v199
  %vm206 = vmor %vm204, %vm205
  %v207 = vsel %vm206, %v199, %v203
  %v208 = vand.u32 2147483647, %v198
  %vm209 = vcmp.eq.f32.partialorder %v208, 8.507059e+37
  %v210 = vand.u32 %v198, 2147483648
  %v211 = vor.u32 1.1754944e-38, %v210
  %v212 = vsel %vm209, %v211, %v207
  %v213 = vmul.f32 1.0, %v212
  %v214 = vtanh.pop %v194
  %v215 = vmul.f32 %v213, 0.0
  %217 = vrot.lane.b32.xlu0 %v214, 64
  %v218 = vpop.permute.xlu0 %217
  %v220 = vmul.f32 %v213, %v218
  %222 = vrot.lane.b32.xlu0 %v220, 32
  %v223 = vpop.permute.xlu0 %222
  %v225 = vadd.f32 %v215, %v223
  %v226 = vtanh.pop %v225
  %228 = vrot.lane.b32.xlu0 %v226, 64
  %v229 = vpop.permute.xlu0 %228
  %v231 = vmul.f32 %v213, %v229
  %v232 = vpack.c.bf16 %v231, %v231
  %234 = vrot.lane.b32.xlu0 %v232, 32
  %v235 = vpop.permute.xlu0 %234
  %v237 = vsel %vm177, %v235, 0
  %239 = vmatpush.bf16.msra.mxu0 0
  %240 = vmatpush.bf16.msra.mxu0 0
  %241 = vmatpush.bf16.msra.mxu0 0
  %242 = vmatpush.bf16.msra.mxu0 0
  %243 = vmatpush.bf16.msra.mxu0 0
  %244 = vmatpush.bf16.msra.mxu0 0
  %245 = vmatpush.bf16.msra.mxu0 %v174
  %246 = vmatpush.bf16.msra.mxu0 %v173
  %247 = vmatmul.bf16.gmra.mxu0 %v237
  %v248 = vpop.f32.mrf.mxu0
  %v249 = vadd.f32 0.0, %v248
  %v250 = vpop.f32.mrf.mxu0
  %251 = vdwg.mxu0
  %v253 = vrot.slane %v249, 6
  %v255 = vadd.f32 %v107, %v253
  %v256 = vxor.u32 %v255, 2147483648
  %v257 = vmul.f32 %v256, 1.442695
  %v258 = vpow.pop %v257
  %v259 = vadd.f32 %v258, 1.0
  %v260 = vrcp.pop %v259
  %v261 = vmul.f32 %v259, %v260
  %v262 = vsub.f32 1.0, %v261
  %v263 = vmul.f32 %v260, %v262
  %v264 = vadd.f32 %v260, %v263
  %vm265 = vweird.f32 %v259
  %vm266 = vweird.f32 %v260
  %vm267 = vmor %vm265, %vm266
  %v268 = vsel %vm267, %v260, %v264
  %v269 = vand.u32 2147483647, %v259
  %vm270 = vcmp.eq.f32.partialorder %v269, 8.507059e+37
  %v271 = vand.u32 %v259, 2147483648
  %v272 = vor.u32 1.1754944e-38, %v271
  %v273 = vsel %vm270, %v272, %v268
  %v274 = vmul.f32 1.0, %v273
  %v275 = vtanh.pop %v255
  %v277 = vrot.slane %v225, 6
  %v279 = vmul.f32 %v274, %v277
  %281 = vrot.lane.b32.xlu0 %v275, 64
  %v282 = vpop.permute.xlu0 %281
  %v284 = vmul.f32 %v274, %v282
  %286 = vrot.lane.b32.xlu0 %v284, 32
  %v287 = vpop.permute.xlu0 %286
  %v289 = vadd.f32 %v279, %v287
  %v290 = vtanh.pop %v289
  %292 = vrot.lane.b32.xlu0 %v290, 64
  %v293 = vpop.permute.xlu0 %292
  %v295 = vmul.f32 %v274, %v293
  %v296 = vpack.c.bf16 %v295, %v295
  %v298 = vrot.slane %v296, 1
  %299 = vrot.lane.b32.xlu0 %v298, 32
  %v300 = vpop.permute.xlu0 %299
  %v302 = vsel %vm177, %v300, 0
  %304 = vmatpush.bf16.msra.mxu0 0
  %305 = vmatpush.bf16.msra.mxu0 0
  %306 = vmatpush.bf16.msra.mxu0 0
  %307 = vmatpush.bf16.msra.mxu0 0
  %308 = vmatpush.bf16.msra.mxu0 0
  %309 = vmatpush.bf16.msra.mxu0 0
  %310 = vmatpush.bf16.msra.mxu0 %v174
  %311 = vmatpush.bf16.msra.mxu0 %v173
  %312 = vmatmul.bf16.gmra.mxu0 %v302
  %v313 = vpop.f32.mrf.mxu0
  %v314 = vadd.f32 0.0, %v313
  %v315 = vpop.f32.mrf.mxu0
  %316 = vdwg.mxu0
  %v318 = vrot.slane %v314, 4
  %v320 = vadd.f32 %v107, %v318
  %v321 = vxor.u32 %v320, 2147483648
  %v322 = vmul.f32 %v321, 1.442695
  %v323 = vpow.pop %v322
  %v324 = vadd.f32 %v323, 1.0
  %v325 = vrcp.pop %v324
  %v326 = vmul.f32 %v324, %v325
  %v327 = vsub.f32 1.0, %v326
  %v328 = vmul.f32 %v325, %v327
  %v329 = vadd.f32 %v325, %v328
  %vm330 = vweird.f32 %v324
  %vm331 = vweird.f32 %v325
  %vm332 = vmor %vm330, %vm331
  %v333 = vsel %vm332, %v325, %v329
  %v334 = vand.u32 2147483647, %v324
  %vm335 = vcmp.eq.f32.partialorder %v334, 8.507059e+37
  %v336 = vand.u32 %v324, 2147483648
  %v337 = vor.u32 1.1754944e-38, %v336
  %v338 = vsel %vm335, %v337, %v333
  %v339 = vmul.f32 1.0, %v338
  %v340 = vtanh.pop %v320
  %v342 = vrot.slane %v289, 6
  %v344 = vmul.f32 %v339, %v342
  %346 = vrot.lane.b32.xlu0 %v340, 64
  %v347 = vpop.permute.xlu0 %346
  %v349 = vmul.f32 %v339, %v347
  %351 = vrot.lane.b32.xlu0 %v349, 32
  %v352 = vpop.permute.xlu0 %351
  %v354 = vadd.f32 %v344, %v352
  %v355 = vtanh.pop %v354
  %357 = vrot.lane.b32.xlu0 %v355, 64
  %v358 = vpop.permute.xlu0 %357
  %v360 = vmul.f32 %v339, %v358
  %v361 = vpack.c.bf16 %v360, %v360
  %v363 = vrot.slane %v361, 2
  %364 = vrot.lane.b32.xlu0 %v363, 32
  %v365 = vpop.permute.xlu0 %364
  %v367 = vsel %vm177, %v365, 0
  %369 = vmatpush.bf16.msra.mxu0 0
  %370 = vmatpush.bf16.msra.mxu0 0
  %371 = vmatpush.bf16.msra.mxu0 0
  %372 = vmatpush.bf16.msra.mxu0 0
  %373 = vmatpush.bf16.msra.mxu0 0
  %374 = vmatpush.bf16.msra.mxu0 0
  %375 = vmatpush.bf16.msra.mxu0 %v174
  %376 = vmatpush.bf16.msra.mxu0 %v173
  %377 = vmatmul.bf16.gmra.mxu0 %v367
  %v378 = vpop.f32.mrf.mxu0
  %v379 = vadd.f32 0.0, %v378
  %v380 = vpop.f32.mrf.mxu0
  %381 = vdwg.mxu0
  %v383 = vrot.slane %v379, 2
  %v385 = vadd.f32 %v107, %v383
  %v386 = vxor.u32 %v385, 2147483648
  %v387 = vmul.f32 %v386, 1.442695
  %v388 = vpow.pop %v387
  %v389 = vadd.f32 %v388, 1.0
  %v390 = vrcp.pop %v389
  %v391 = vmul.f32 %v389, %v390
  %v392 = vsub.f32 1.0, %v391
  %v393 = vmul.f32 %v390, %v392
  %v394 = vadd.f32 %v390, %v393
  %vm395 = vweird.f32 %v389
  %vm396 = vweird.f32 %v390
  %vm397 = vmor %vm395, %vm396
  %v398 = vsel %vm397, %v390, %v394
  %v399 = vand.u32 2147483647, %v389
  %vm400 = vcmp.eq.f32.partialorder %v399, 8.507059e+37
  %v401 = vand.u32 %v389, 2147483648
  %v402 = vor.u32 1.1754944e-38, %v401
  %v403 = vsel %vm400, %v402, %v398
  %v404 = vmul.f32 1.0, %v403
  %v405 = vtanh.pop %v385
  %v407 = vrot.slane %v354, 6
  %v409 = vmul.f32 %v404, %v407
  %411 = vrot.lane.b32.xlu0 %v405, 64
  %v412 = vpop.permute.xlu0 %411
  %v414 = vmul.f32 %v404, %v412
  %416 = vrot.lane.b32.xlu0 %v414, 32
  %v417 = vpop.permute.xlu0 %416
  %v419 = vadd.f32 %v409, %v417
  %v420 = vtanh.pop %v419
  %422 = vrot.lane.b32.xlu0 %v420, 64
  %v423 = vpop.permute.xlu0 %422
  %v425 = vmul.f32 %v404, %v423
  %v426 = vpack.c.bf16 %v425, %v425
  %v428 = vrot.slane %v426, 3
  %429 = vrot.lane.b32.xlu0 %v428, 32
  %v430 = vpop.permute.xlu0 %429
  %v432 = vsel %vm177, %v430, 0
  %434 = vmatpush.bf16.msra.mxu0 0
  %435 = vmatpush.bf16.msra.mxu0 0
  %436 = vmatpush.bf16.msra.mxu0 0
  %437 = vmatpush.bf16.msra.mxu0 0
  %438 = vmatpush.bf16.msra.mxu0 0
  %439 = vmatpush.bf16.msra.mxu0 0
  %440 = vmatpush.bf16.msra.mxu0 %v174
  %441 = vmatpush.bf16.msra.mxu0 %v173
  %442 = vmatmul.bf16.gmra.mxu0 %v432
  %v443 = vpop.f32.mrf.mxu0
  %v444 = vadd.f32 0.0, %v443
  %v445 = vpop.f32.mrf.mxu0
  %446 = vdwg.mxu0
  %v447 = vadd.f32 %v109, %v444
  %v448 = vxor.u32 %v447, 2147483648
  %v449 = vmul.f32 %v448, 1.442695
  %v450 = vpow.pop %v449
  %v451 = vadd.f32 %v450, 1.0
  %v452 = vrcp.pop %v451
  %v453 = vmul.f32 %v451, %v452
  %v454 = vsub.f32 1.0, %v453
  %v455 = vmul.f32 %v452, %v454
  %v456 = vadd.f32 %v452, %v455
  %vm457 = vweird.f32 %v451
  %vm458 = vweird.f32 %v452
  %vm459 = vmor %vm457, %vm458
  %v460 = vsel %vm459, %v452, %v456
  %v461 = vand.u32 2147483647, %v451
  %vm462 = vcmp.eq.f32.partialorder %v461, 8.507059e+37
  %v463 = vand.u32 %v451, 2147483648
  %v464 = vor.u32 1.1754944e-38, %v463
  %v465 = vsel %vm462, %v464, %v460
  %v466 = vmul.f32 1.0, %v465
  %v467 = vtanh.pop %v447
  %v469 = vrot.slane %v419, 6
  %v471 = vmul.f32 %v466, %v469
  %473 = vrot.lane.b32.xlu0 %v467, 64
  %v474 = vpop.permute.xlu0 %473
  %v476 = vmul.f32 %v466, %v474
  %478 = vrot.lane.b32.xlu0 %v476, 32
  %v479 = vpop.permute.xlu0 %478
  %v481 = vadd.f32 %v471, %v479
  %v482 = vtanh.pop %v481
  %484 = vrot.lane.b32.xlu0 %v482, 64
  %v485 = vpop.permute.xlu0 %484
  %v487 = vmul.f32 %v466, %v485
  %v488 = vpack.c.bf16 %v487, %v487
  %490 = vrot.lane.b32.xlu0 %v488, 32
  %v491 = vpop.permute.xlu0 %490
  %v493 = vsel %vm177, %v491, 0
  %495 = vmatpush.bf16.msra.mxu0 0
  %496 = vmatpush.bf16.msra.mxu0 0
  %497 = vmatpush.bf16.msra.mxu0 0
  %498 = vmatpush.bf16.msra.mxu0 0
  %499 = vmatpush.bf16.msra.mxu0 0
  %500 = vmatpush.bf16.msra.mxu0 0
  %501 = vmatpush.bf16.msra.mxu0 %v174
  %502 = vmatpush.bf16.msra.mxu0 %v173
  %503 = vmatmul.bf16.gmra.mxu0 %v493
  %v504 = vpop.f32.mrf.mxu0
  %v505 = vadd.f32 0.0, %v504
  %v506 = vpop.f32.mrf.mxu0
  %507 = vdwg.mxu0
  %v509 = vrot.slane %v505, 6
  %v511 = vadd.f32 %v109, %v509
  %v512 = vxor.u32 %v511, 2147483648
  %v513 = vmul.f32 %v512, 1.442695
  %v514 = vpow.pop %v513
  %v515 = vadd.f32 %v514, 1.0
  %v516 = vrcp.pop %v515
  %v517 = vmul.f32 %v515, %v516
  %v518 = vsub.f32 1.0, %v517
  %v519 = vmul.f32 %v516, %v518
  %v520 = vadd.f32 %v516, %v519
  %vm521 = vweird.f32 %v515
  %vm522 = vweird.f32 %v516
  %vm523 = vmor %vm521, %vm522
  %v524 = vsel %vm523, %v516, %v520
  %v525 = vand.u32 2147483647, %v515
  %vm526 = vcmp.eq.f32.partialorder %v525, 8.507059e+37
  %v527 = vand.u32 %v515, 2147483648
  %v528 = vor.u32 1.1754944e-38, %v527
  %v529 = vsel %vm526, %v528, %v524
  %v530 = vmul.f32 1.0, %v529
  %v531 = vtanh.pop %v511
  %v533 = vrot.slane %v481, 6
  %v535 = vmul.f32 %v530, %v533
  %537 = vrot.lane.b32.xlu0 %v531, 64
  %v538 = vpop.permute.xlu0 %537
  %v540 = vmul.f32 %v530, %v538
  %542 = vrot.lane.b32.xlu0 %v540, 32
  %v543 = vpop.permute.xlu0 %542
  %v545 = vadd.f32 %v535, %v543
  %v546 = vtanh.pop %v545
  %548 = vrot.lane.b32.xlu0 %v546, 64
  %v549 = vpop.permute.xlu0 %548
  %v551 = vmul.f32 %v530, %v549
  %v552 = vpack.c.bf16 %v551, %v551
  %v554 = vrot.slane %v552, 1
  %555 = vrot.lane.b32.xlu0 %v554, 32
  %v556 = vpop.permute.xlu0 %555
  %v558 = vsel %vm177, %v556, 0
  %560 = vmatpush.bf16.msra.mxu0 0
  %561 = vmatpush.bf16.msra.mxu0 0
  %562 = vmatpush.bf16.msra.mxu0 0
  %563 = vmatpush.bf16.msra.mxu0 0
  %564 = vmatpush.bf16.msra.mxu0 0
  %565 = vmatpush.bf16.msra.mxu0 0
  %566 = vmatpush.bf16.msra.mxu0 %v174
  %567 = vmatpush.bf16.msra.mxu0 %v173
  %568 = vmatmul.bf16.gmra.mxu0 %v558
  %v569 = vpop.f32.mrf.mxu0
  %v570 = vadd.f32 0.0, %v569
  %v571 = vpop.f32.mrf.mxu0
  %572 = vdwg.mxu0
  %v574 = vrot.slane %v570, 4
  %v576 = vadd.f32 %v109, %v574
  %v577 = vxor.u32 %v576, 2147483648
  %v578 = vmul.f32 %v577, 1.442695
  %v579 = vpow.pop %v578
  %v580 = vadd.f32 %v579, 1.0
  %v581 = vrcp.pop %v580
  %v582 = vmul.f32 %v580, %v581
  %v583 = vsub.f32 1.0, %v582
  %v584 = vmul.f32 %v581, %v583
  %v585 = vadd.f32 %v581, %v584
  %vm586 = vweird.f32 %v580
  %vm587 = vweird.f32 %v581
  %vm588 = vmor %vm586, %vm587
  %v589 = vsel %vm588, %v581, %v585
  %v590 = vand.u32 2147483647, %v580
  %vm591 = vcmp.eq.f32.partialorder %v590, 8.507059e+37
  %v592 = vand.u32 %v580, 2147483648
  %v593 = vor.u32 1.1754944e-38, %v592
  %v594 = vsel %vm591, %v593, %v589
  %v595 = vmul.f32 1.0, %v594
  %v596 = vtanh.pop %v576
  %v598 = vrot.slane %v545, 6
  %v600 = vmul.f32 %v595, %v598
  %602 = vrot.lane.b32.xlu0 %v596, 64
  %v603 = vpop.permute.xlu0 %602
  %v605 = vmul.f32 %v595, %v603
  %607 = vrot.lane.b32.xlu0 %v605, 32
  %v608 = vpop.permute.xlu0 %607
  %v610 = vadd.f32 %v600, %v608
  %v611 = vtanh.pop %v610
  %613 = vrot.lane.b32.xlu0 %v611, 64
  %v614 = vpop.permute.xlu0 %613
  %v616 = vmul.f32 %v595, %v614
  %v617 = vpack.c.bf16 %v616, %v616
  %v619 = vrot.slane %v617, 2
  %620 = vrot.lane.b32.xlu0 %v619, 32
  %v621 = vpop.permute.xlu0 %620
  %v623 = vsel %vm177, %v621, 0
  %625 = vmatpush.bf16.msra.mxu0 0
  %626 = vmatpush.bf16.msra.mxu0 0
  %627 = vmatpush.bf16.msra.mxu0 0
  %628 = vmatpush.bf16.msra.mxu0 0
  %629 = vmatpush.bf16.msra.mxu0 0
  %630 = vmatpush.bf16.msra.mxu0 0
  %631 = vmatpush.bf16.msra.mxu0 %v174
  %632 = vmatpush.bf16.msra.mxu0 %v173
  %633 = vmatmul.bf16.gmra.mxu0 %v623
  %v634 = vpop.f32.mrf.mxu0
  %v635 = vadd.f32 0.0, %v634
  %v636 = vpop.f32.mrf.mxu0
  %637 = vdwg.mxu0
  %v639 = vrot.slane %v635, 2
  %v641 = vadd.f32 %v109, %v639
  %v642 = vxor.u32 %v641, 2147483648
  %v643 = vmul.f32 %v642, 1.442695
  %v644 = vpow.pop %v643
  %v645 = vadd.f32 %v644, 1.0
  %v646 = vrcp.pop %v645
  %v647 = vmul.f32 %v645, %v646
  %v648 = vsub.f32 1.0, %v647
  %v649 = vmul.f32 %v646, %v648
  %v650 = vadd.f32 %v646, %v649
  %vm651 = vweird.f32 %v645
  %vm652 = vweird.f32 %v646
  %vm653 = vmor %vm651, %vm652
  %v654 = vsel %vm653, %v646, %v650
  %v655 = vand.u32 2147483647, %v645
  %vm656 = vcmp.eq.f32.partialorder %v655, 8.507059e+37
  %v657 = vand.u32 %v645, 2147483648
  %v658 = vor.u32 1.1754944e-38, %v657
  %v659 = vsel %vm656, %v658, %v654
  %v660 = vmul.f32 1.0, %v659
  %v661 = vtanh.pop %v641
  %v663 = vrot.slane %v610, 6
  %v665 = vmul.f32 %v660, %v663
  %667 = vrot.lane.b32.xlu0 %v661, 64
  %v668 = vpop.permute.xlu0 %667
  %v670 = vmul.f32 %v660, %v668
  %672 = vrot.lane.b32.xlu0 %v670, 32
  %v673 = vpop.permute.xlu0 %672
  %v675 = vadd.f32 %v665, %v673
  %v676 = vtanh.pop %v675
  %678 = vrot.lane.b32.xlu0 %v676, 64
  %v679 = vpop.permute.xlu0 %678
  %v681 = vmul.f32 %v660, %v679
  %v686 = vunpack.c.l.b16 %v48
  %v687 = vunpack.c.l.b16 %v49
  %v688 = vunpack.c.l.b16 %v50
  %v689 = vunpack.c.l.b16 %v51
  %v690 = vpack.c.b16 %v687, %v686
  %v691 = vpack.c.b16 %v689, %v688
  %694 = vmatpush.bf16.msra.mxu0 0
  %695 = vmatpush.bf16.msra.mxu0 0
  %696 = vmatpush.bf16.msra.mxu0 0
  %697 = vmatpush.bf16.msra.mxu0 0
  %698 = vmatpush.bf16.msra.mxu0 0
  %699 = vmatpush.bf16.msra.mxu0 0
  %700 = vmatpush.bf16.msra.mxu0 %v691
  %701 = vmatpush.bf16.msra.mxu0 %v690
  %702 = vmatmul.bf16.gmra.mxu0 %v179
  %v703 = vpop.f32.mrf.mxu0
  %v704 = vadd.f32 0.0, %v703
  %v705 = vpop.f32.mrf.mxu0
  %706 = vdwg.mxu0
  %v707 = vadd.f32 %v162, %v704
  %v708 = vxor.u32 %v707, 2147483648
  %v709 = vmul.f32 %v708, 1.442695
  %v710 = vpow.pop %v709
  %v711 = vadd.f32 %v710, 1.0
  %v712 = vrcp.pop %v711
  %v713 = vmul.f32 %v711, %v712
  %v714 = vsub.f32 1.0, %v713
  %v715 = vmul.f32 %v712, %v714
  %v716 = vadd.f32 %v712, %v715
  %vm717 = vweird.f32 %v711
  %vm718 = vweird.f32 %v712
  %vm719 = vmor %vm717, %vm718
  %v720 = vsel %vm719, %v712, %v716
  %v721 = vand.u32 2147483647, %v711
  %vm722 = vcmp.eq.f32.partialorder %v721, 8.507059e+37
  %v723 = vand.u32 %v711, 2147483648
  %v724 = vor.u32 1.1754944e-38, %v723
  %v725 = vsel %vm722, %v724, %v720
  %v726 = vmul.f32 1.0, %v725
  %v727 = vtanh.pop %v707
  %v728 = vmul.f32 %v726, 0.0
  %730 = vrot.lane.b32.xlu0 %v727, 64
  %v731 = vpop.permute.xlu0 %730
  %v733 = vmul.f32 %v726, %v731
  %735 = vrot.lane.b32.xlu0 %v733, 32
  %v736 = vpop.permute.xlu0 %735
  %v738 = vadd.f32 %v728, %v736
  %v739 = vtanh.pop %v738
  %741 = vrot.lane.b32.xlu0 %v739, 64
  %v742 = vpop.permute.xlu0 %741
  %v744 = vmul.f32 %v726, %v742
  %v745 = vpack.c.bf16 %v681, %v681
  %v746 = vld [vmem:[%s7] sm:$0xf]
  %v747 = vld [vmem:[%s7 + $0x4] sm:$0xf]
  %v748 = vld [vmem:[%s7 + $0x8] sm:$0xf]
  %v749 = vld [vmem:[%s7 + $0xc] sm:$0xf]
  %v750 = vpack.c.bf16 %v744, %v744
  %v751 = vld [vmem:[%s8] sm:$0xf]
  %v752 = vld [vmem:[%s8 + $0x4] sm:$0xf]
  %v753 = vld [vmem:[%s8 + $0x8] sm:$0xf]
  %v754 = vld [vmem:[%s8 + $0xc] sm:$0xf]
  %756 = vrot.lane.b32.xlu0 %v750, 32
  %v757 = vpop.permute.xlu0 %756
  %v762 = vunpack.c.l.b16 %v751
  %v763 = vunpack.c.l.b16 %v752
  %v764 = vunpack.c.l.b16 %v753
  %v765 = vunpack.c.l.b16 %v754
  %v766 = vpack.c.b16 %v763, %v762
  %v767 = vpack.c.b16 %v765, %v764
  %v771 = vsel %vm177, %v757, 0
  %773 = vmatpush.bf16.msra.mxu0 0
  %774 = vmatpush.bf16.msra.mxu0 0
  %775 = vmatpush.bf16.msra.mxu0 0
  %776 = vmatpush.bf16.msra.mxu0 0
  %777 = vmatpush.bf16.msra.mxu0 0
  %778 = vmatpush.bf16.msra.mxu0 0
  %779 = vmatpush.bf16.msra.mxu0 %v767
  %780 = vmatpush.bf16.msra.mxu0 %v766
  %781 = vmatmul.bf16.gmra.mxu0 %v771
  %v782 = vpop.f32.mrf.mxu0
  %v783 = vadd.f32 0.0, %v782
  %v784 = vpop.f32.mrf.mxu0
  %785 = vdwg.mxu0
  %v787 = vrot.slane %v745, 3
  %788 = vrot.lane.b32.xlu0 %v787, 32
  %v789 = vpop.permute.xlu0 %788
  %v794 = vunpack.c.l.b16 %v746
  %v795 = vunpack.c.l.b16 %v747
  %v796 = vunpack.c.l.b16 %v748
  %v797 = vunpack.c.l.b16 %v749
  %v798 = vpack.c.b16 %v795, %v794
  %v799 = vpack.c.b16 %v797, %v796
  %v803 = vsel %vm177, %v789, 0
  %805 = vmatpush.bf16.msra.mxu0 0
  %806 = vmatpush.bf16.msra.mxu0 0
  %807 = vmatpush.bf16.msra.mxu0 0
  %808 = vmatpush.bf16.msra.mxu0 0
  %809 = vmatpush.bf16.msra.mxu0 0
  %810 = vmatpush.bf16.msra.mxu0 0
  %811 = vmatpush.bf16.msra.mxu0 %v799
  %812 = vmatpush.bf16.msra.mxu0 %v798
  %813 = vmatmul.bf16.gmra.mxu0 %v803
  %v814 = vpop.f32.mrf.mxu0
  %v815 = vadd.f32 %v783, %v814
  %v816 = vpop.f32.mrf.mxu0
  %817 = vdwg.mxu0
  %v818 = vld [vmem:[%s9] sm:$0x1]
  %v820 = vperm.slane %v818, 0
  %v822 = vadd.f32 %v815, %v820
  %v823 = vmax.f32 %v822, 0.0
  %v824 = vpack.c.bf16 %v823, %v823
  %v825 = vld [vmem:[%s10] sm:$0xf]
  %v826 = vld [vmem:[%s10 + $0x4] sm:$0xf]
  %v827 = vld [vmem:[%s10 + $0x8] sm:$0xf]
  %v828 = vld [vmem:[%s10 + $0xc] sm:$0xf]
  %v829 = vld [vmem:[%s10 + $0x10] sm:$0xf]
  %v830 = vld [vmem:[%s10 + $0x14] sm:$0xf]
  %v831 = vld [vmem:[%s10 + $0x18] sm:$0x1]
  %v832 = vld [vmem:[%s11] sm:$0x1]
  %v834 = vperm.slane %v832, 0
  %v843 = vunpack.c.l.b16 %v825
  %v844 = vunpack.c.l.b16 %v826
  %v845 = vunpack.c.l.b16 %v827
  %v846 = vunpack.c.l.b16 %v828
  %v847 = vunpack.c.l.b16 %v829
  %v848 = vunpack.c.l.b16 %v830
  %v849 = vunpack.c.l.b16 %v831
  %v850 = vpack.c.b16 %v844, %v843
  %v851 = vpack.c.b16 %v846, %v845
  %v852 = vpack.c.b16 %v848, %v847
  %v853 = vpack.c.b16 %v849, %v849
  %vm857 = vcmask 408576
  %v859 = vsel %vm857, %v824, 0
  %vm861 = vcmask 1040384
  %v863 = vsel %vm861, %v853, 0
  %865 = vmatpush.bf16.msra.mxu0 0
  %866 = vmatpush.bf16.msra.mxu0 0
  %867 = vmatpush.bf16.msra.mxu0 0
  %868 = vmatpush.bf16.msra.mxu0 0
  %869 = vmatpush.bf16.msra.mxu0 %v863
  %870 = vmatpush.bf16.msra.mxu0 %v852
  %871 = vmatpush.bf16.msra.mxu0 %v851
  %872 = vmatpush.bf16.msra.mxu0 %v850
  %873 = vmatmul.bf16.gmra.mxu0 %v859
  %v874 = vpop.f32.mrf.mxu0
  %v875 = vadd.f32 %v834, %v874
  %v876 = vpop.f32.mrf.mxu0
  %877 = vdwg.mxu0
  %v878 = vxor.u32 %v875, 2147483648
  %v879 = vmul.f32 %v878, 1.442695
  %v880 = vpow.pop %v879
  %v881 = vadd.f32 %v880, 1.0
  %v882 = vrcp.pop %v881
  %v883 = vmul.f32 %v881, %v882
  %v884 = vsub.f32 1.0, %v883
  %v885 = vmul.f32 %v882, %v884
  %v886 = vadd.f32 %v882, %v885
  %vm887 = vweird.f32 %v881
  %vm888 = vweird.f32 %v882
  %vm889 = vmor %vm887, %vm888
  %v890 = vsel %vm889, %v882, %v886
  %v891 = vand.u32 2147483647, %v881
  %vm892 = vcmp.eq.f32.partialorder %v891, 8.507059e+37
  %v893 = vand.u32 %v881, 2147483648
  %v894 = vor.u32 1.1754944e-38, %v893
  %v895 = vsel %vm892, %v894, %v890
  %v896 = vmul.f32 1.0, %v895
  %vm897 = vcmask 33792
  %898 = vst.msk [vmem:[%s12] sm:$0x3] %vm897, %v896
  // Predicated region
  $region50: #{sentiment_forward.1} parent=0 // pred_check
    _
  $region51: #{sentiment_forward.1} parent=0 // pred_check_branch
    %900 = sbr.rel (0) target = $region53
  $region52: #{sentiment_forward.1} parent=0 // pred_region
    _
  $region53: #{sentiment_forward.1} parent=0 // pred_fallthru
    _
  // Predicated region
  $region54: #{sentiment_forward.1} parent=0 // pred_check
    _
  $region55: #{sentiment_forward.1} parent=0 // pred_check_branch
    %902 = sbr.rel (0) target = $region57
  $region56: #{sentiment_forward.1} parent=0 // pred_region
    _
  $region57: #{sentiment_forward.1} parent=0 // pred_fallthru
    _

</llo_original>
